<compile_context>
chip_gen: v7x
topology: tpu7x:2x2x1
jax: 0.10.0
libtpu: 0.0.40
codegen_flags: <defaults>
</compile_context>

<pallas_src>
import jax
import jax.numpy as jnp
from jax.experimental import pallas as pl
from jax.experimental.pallas import tpu as pltpu

STATE_DIM = 8
HIDDEN_DIM = 32
SEQ_LEN = 8


def _iaf_kernel(x_ref, wih_ref, whh_ref, b_ref, wout_ref, bout_ref,
                noise_ref, out_ref):
    H = HIDDEN_DIM
    B, S = out_ref.shape
    T = x_ref.shape[0] // B

    # Hoisted input projection for all timesteps (+ combined LSTM biases):
    # (T*B, S)bf16 @ (S, 4H)bf16 -> f32 (T*B, 4H); one MXU pass, no per-step
    # bias adds on the serial path.
    xproj = (jnp.dot(x_ref[...].astype(jnp.bfloat16), wih_ref[...],
                     preferred_element_type=jnp.float32)
             + b_ref[...])

    whh = whh_ref[...]                    # (H, 4H) bf16, vreg-resident.
    # TODO(synk): hold whh staged inside the MXU across the recurrence
    # (pltpu.matmul_push_rhs / matmul_acc_lhs, MRB accumulate on v7x); kept on
    # the portable jnp.dot path here.

    # Activation affine map: lanes 0:3H (i,f,o) use sigmoid(x)=0.5*tanh(x/2)+0.5,
    # lanes 3H:4H (g) use plain tanh, so  act = tanh(gates * s) * s + a.
    lane = jax.lax.broadcasted_iota(jnp.int32, (1, 4 * H), 1)
    is_sig = lane < 3 * H
    s = jnp.where(is_sig, jnp.float32(0.5), jnp.float32(1.0))
    a = jnp.where(is_sig, jnp.float32(0.5), jnp.float32(0.0))

    # h_0 = c_0 = 0 (PyTorch LSTM default); carried as f32 values (vregs only).
    h = jnp.zeros((B, H), jnp.float32)
    c = jnp.zeros((B, H), jnp.float32)

    # Fully unrolled serial recurrence. Gate lane order: [i, f, o, g].
    for t in range(T):
        gates = xproj[t * B:(t + 1) * B, :] + jnp.dot(
            h.astype(jnp.bfloat16), whh, preferred_element_type=jnp.float32)
        act = jnp.tanh(gates * s) * s + a        # single 128-lane EUP push
        i_g = act[:, 0:H]
        f_g = act[:, H:2 * H]
        o_g = act[:, 2 * H:3 * H]
        g_g = act[:, 3 * H:4 * H]
        c = f_g * c + i_g * g_g
        h = o_g * jnp.tanh(c)

    # Fused output heads: (B, H) @ (H, 2S) + (1, 2S) -> [mean | log_std].
    heads = (jnp.dot(h.astype(jnp.bfloat16), wout_ref[...],
                     preferred_element_type=jnp.float32)
             + bout_ref[...])
    mean = heads[:, 0:S]
    log_std = jnp.clip(heads[:, S:2 * S], -30.0, 30.0)   # exp overflow guard
    # Reparameterized sample of torch.normal(mean, std).
    out_ref[...] = mean + jnp.exp(log_std) * noise_ref[...]


def _iaf_call(x_time_major, params, noise):
    """x_time_major: (T*B, state_dim) f32, time-major.  noise: (B, state_dim)."""
    B = noise.shape[0]
    vmem = pl.BlockSpec(memory_space=pltpu.MemorySpace.VMEM)
    kernel = pl.pallas_call(
        _iaf_kernel,
        out_shape=jax.ShapeDtypeStruct((B, STATE_DIM), jnp.float32),
        in_specs=[vmem] * 7,
        out_specs=vmem,
    )
    return kernel(
        x_time_major,
        params["w_ih_T"], params["w_hh_T"], params["b_lstm"],
        params["w_out_T"], params["b_out"],
        noise,
    )


def iaf_forward(state, params, noise):
    """Module-faithful forward: state (T, state_dim) -> derived_state (1, state_dim)."""
    return _iaf_call(state, params, noise)


def iaf_forward_batched(states, params, noise):
    """Batched forward: states (B, T, state_dim), noise (B, state_dim) -> (B, state_dim)."""
    B, T, S = states.shape
    x_tm = jnp.transpose(states, (1, 0, 2)).reshape(T * B, S)   # time-major
    return _iaf_call(x_tm, params, noise)


def init_raw_params(key, state_dim=STATE_DIM, hidden_dim=HIDDEN_DIM):
    """Synthetic parameters in the PyTorch module's native layout (f32)."""
    keys = jax.random.split(key, 8)
    k = 1.0 / jnp.sqrt(hidden_dim)

    def u(kk, shape):
        return jax.random.uniform(kk, shape, jnp.float32, -k, k)

    H = hidden_dim
    return {
        # nn.LSTM: gate row order [i, f, g, o]
        "w_ih": u(keys[0], (4 * H, state_dim)),
        "w_hh": u(keys[1], (4 * H, H)),
        "b_ih": u(keys[2], (4 * H,)),
        "b_hh": u(keys[3], (4 * H,)),
        # nn.Linear heads
        "w_mean": u(keys[4], (state_dim, H)),
        "b_mean": u(keys[5], (state_dim,)),
        "w_std": u(keys[6], (state_dim, H)),
        "b_std": u(keys[7], (state_dim,)),
    }


def pack_params(raw, state_dim=STATE_DIM, hidden_dim=HIDDEN_DIM):
    """Repack into the kernel-friendly layout: gate order [i, f, o, g],
    weights pre-transposed and stored in bf16 (MXU-native), biases in f32."""
    H = hidden_dim
    perm = jnp.concatenate([
        jnp.arange(0, H),            # i
        jnp.arange(H, 2 * H),        # f
        jnp.arange(3 * H, 4 * H),    # o
        jnp.arange(2 * H, 3 * H),    # g
    ])
    return {
        "w_ih_T": raw["w_ih"][perm].T.astype(jnp.bfloat16),          # (S, 4H)
        "w_hh_T": raw["w_hh"][perm].T.astype(jnp.bfloat16),          # (H, 4H)
        "b_lstm": (raw["b_ih"] + raw["b_hh"])[perm].reshape(1, 4 * H),
        "w_out_T": jnp.concatenate(
            [raw["w_mean"].T, raw["w_std"].T], axis=1).astype(jnp.bfloat16),
        "b_out": jnp.concatenate(
            [raw["b_mean"], raw["b_std"]]).reshape(1, 2 * state_dim),
    }


def iaf_reference(raw, state, noise):
    """Pure-JAX f32 reference with PyTorch LSTM semantics (gate order i,f,g,o)."""
    H = HIDDEN_DIM
    T = state.shape[0]
    h = jnp.zeros((H,), jnp.float32)
    c = jnp.zeros((H,), jnp.float32)
    for t in range(T):
        z = (raw["w_ih"] @ state[t] + raw["b_ih"]
             + raw["w_hh"] @ h + raw["b_hh"])
        i = jax.nn.sigmoid(z[0:H])
        f = jax.nn.sigmoid(z[H:2 * H])
        g = jnp.tanh(z[2 * H:3 * H])
        o = jax.nn.sigmoid(z[3 * H:4 * H])
        c = f * c + i * g
        h = o * jnp.tanh(c)
    mean = raw["w_mean"] @ h + raw["b_mean"]
    log_std = raw["w_std"] @ h + raw["b_std"]
    return mean + jnp.exp(log_std) * noise


if __name__ == "__main__":
    root = jax.random.PRNGKey(0)
    k_params, k_state, k_noise, k_bstate, k_bnoise = jax.random.split(root, 5)

    raw = init_raw_params(k_params)
    params = pack_params(raw)

    # --- Module-faithful single-sequence forward (batch 1) ---
    state = jax.random.normal(k_state, (SEQ_LEN, STATE_DIM), jnp.float32)
    noise = jax.random.normal(k_noise, (1, STATE_DIM), jnp.float32)
    derived_state = jax.block_until_ready(iaf_forward(state, params, noise))
    assert derived_state.shape == (1, STATE_DIM)
    assert jnp.all(jnp.isfinite(derived_state))
    ref = iaf_reference(raw, state, noise[0])
    # bf16 MXU inputs vs f32 reference: tolerance-checked per the review.
    assert jnp.allclose(derived_state[0], ref, rtol=5e-2, atol=5e-2)

    # --- Batched path (fills vreg sublanes / MXU rows) ---
    B = 8
    states = jax.random.normal(k_bstate, (B, SEQ_LEN, STATE_DIM), jnp.float32)
    bnoise = jax.random.normal(k_bnoise, (B, STATE_DIM), jnp.float32)
    bderived = jax.block_until_ready(iaf_forward_batched(states, params, bnoise))
    assert bderived.shape == (B, STATE_DIM)
    assert jnp.all(jnp.isfinite(bderived))
    bref = jnp.stack([iaf_reference(raw, states[b], bnoise[b]) for b in range(B)])
    assert jnp.allclose(bderived, bref, rtol=5e-2, atol=5e-2)

    print("KERNEL_OK")
</pallas_src>

<mosaic_0001>
module attributes {stable_mosaic.version = 11 : i64} {
  func.func @_iaf_kernel(%arg0: memref<8x8xf32, #tpu.memory_space<vmem>>, %arg1: memref<8x128xbf16, #tpu.memory_space<vmem>>, %arg2: memref<32x128xbf16, #tpu.memory_space<vmem>>, %arg3: memref<1x128xf32, #tpu.memory_space<vmem>>, %arg4: memref<32x16xbf16, #tpu.memory_space<vmem>>, %arg5: memref<1x16xf32, #tpu.memory_space<vmem>>, %arg6: memref<1x8xf32, #tpu.memory_space<vmem>>, %arg7: memref<1x8xf32, #tpu.memory_space<vmem>>) attributes {dimension_semantics = [], scalar_prefetch = 0 : i64, scratch_operands = 0 : i64, tpu.core_type = #tpu.core_type<tc>} {
    %c0 = arith.constant 0 : index
    %c0_0 = arith.constant 0 : index
    %0 = vector.load %arg0[%c0, %c0_0] : memref<8x8xf32, #tpu.memory_space<vmem>>, vector<8x8xf32>
    %1 = arith.truncf %0 : vector<8x8xf32> to vector<8x8xbf16>
    %c0_1 = arith.constant 0 : index
    %c0_2 = arith.constant 0 : index
    %2 = vector.load %arg1[%c0_1, %c0_2] : memref<8x128xbf16, #tpu.memory_space<vmem>>, vector<8x128xbf16>
    %cst = arith.constant dense<0.000000e+00> : vector<8x128xf32>
    %3 = tpu.matmul %1, %2, %cst {dimension_numbers = #tpu.dot_dimension_numbers<[1], [0], [0], [1], [0, 0, 1, 1], [], []>} : vector<8x8xbf16>, vector<8x128xbf16>, vector<8x128xf32> -> vector<8x128xf32>
    %c0_3 = arith.constant 0 : index
    %c0_4 = arith.constant 0 : index
    %4 = vector.load %arg3[%c0_3, %c0_4] : memref<1x128xf32, #tpu.memory_space<vmem>>, vector<1x128xf32>
    %5 = vector.broadcast %4 : vector<1x128xf32> to vector<8x128xf32>
    %6 = arith.addf %3, %5 : vector<8x128xf32>
    %c0_5 = arith.constant 0 : index
    %c0_6 = arith.constant 0 : index
    %7 = vector.load %arg2[%c0_5, %c0_6] : memref<32x128xbf16, #tpu.memory_space<vmem>>, vector<32x128xbf16>
    %8 = tpu.iota {dimensions = array<i32: 1>} : vector<1x128xi32>
    %c96_i32 = arith.constant 96 : i32
    %9 = vector.broadcast %c96_i32 : i32 to vector<1x128xi32>
    %10 = arith.cmpi slt, %8, %9 : vector<1x128xi32>
    %cst_7 = arith.constant 5.000000e-01 : f32
    %cst_8 = arith.constant 1.000000e+00 : f32
    %11 = vector.broadcast %cst_7 : f32 to vector<1x128xf32>
    %12 = vector.broadcast %cst_8 : f32 to vector<1x128xf32>
    %13 = arith.select %10, %11, %12 : vector<1x128xi1>, vector<1x128xf32>
    %cst_9 = arith.constant 5.000000e-01 : f32
    %cst_10 = arith.constant 0.000000e+00 : f32
    %14 = vector.broadcast %cst_9 : f32 to vector<1x128xf32>
    %15 = vector.broadcast %cst_10 : f32 to vector<1x128xf32>
    %16 = arith.select %10, %14, %15 : vector<1x128xi1>, vector<1x128xf32>
    %cst_11 = arith.constant 0.000000e+00 : f32
    %17 = vector.broadcast %cst_11 : f32 to vector<1x32xf32>
    %cst_12 = arith.constant 0.000000e+00 : f32
    %18 = vector.broadcast %cst_12 : f32 to vector<1x32xf32>
    %19 = vector.extract_strided_slice %6 {offsets = [0, 0], sizes = [1, 128], strides = [1, 1]} : vector<8x128xf32> to vector<1x128xf32>
    %20 = arith.truncf %17 : vector<1x32xf32> to vector<1x32xbf16>
    %cst_13 = arith.constant dense<0.000000e+00> : vector<1x128xf32>
    %21 = tpu.matmul %20, %7, %cst_13 {dimension_numbers = #tpu.dot_dimension_numbers<[1], [0], [0], [1], [0, 0, 1, 1], [], []>} : vector<1x32xbf16>, vector<32x128xbf16>, vector<1x128xf32> -> vector<1x128xf32>
    %22 = arith.addf %19, %21 : vector<1x128xf32>
    %23 = arith.mulf %22, %13 : vector<1x128xf32>
    %24 = math.tanh %23 : vector<1x128xf32>
    %25 = arith.mulf %24, %13 : vector<1x128xf32>
    %26 = arith.addf %25, %16 : vector<1x128xf32>
    %27 = vector.extract_strided_slice %26 {offsets = [0, 0], sizes = [1, 32], strides = [1, 1]} : vector<1x128xf32> to vector<1x32xf32>
    %28 = vector.extract_strided_slice %26 {offsets = [0, 32], sizes = [1, 32], strides = [1, 1]} : vector<1x128xf32> to vector<1x32xf32>
    %29 = vector.extract_strided_slice %26 {offsets = [0, 64], sizes = [1, 32], strides = [1, 1]} : vector<1x128xf32> to vector<1x32xf32>
    %30 = vector.extract_strided_slice %26 {offsets = [0, 96], sizes = [1, 32], strides = [1, 1]} : vector<1x128xf32> to vector<1x32xf32>
    %31 = arith.mulf %28, %18 : vector<1x32xf32>
    %32 = arith.mulf %27, %30 : vector<1x32xf32>
    %33 = arith.addf %31, %32 : vector<1x32xf32>
    %34 = math.tanh %33 : vector<1x32xf32>
    %35 = arith.mulf %29, %34 : vector<1x32xf32>
    %36 = vector.extract_strided_slice %6 {offsets = [1, 0], sizes = [1, 128], strides = [1, 1]} : vector<8x128xf32> to vector<1x128xf32>
    %37 = arith.truncf %35 : vector<1x32xf32> to vector<1x32xbf16>
    %cst_14 = arith.constant dense<0.000000e+00> : vector<1x128xf32>
    %38 = tpu.matmul %37, %7, %cst_14 {dimension_numbers = #tpu.dot_dimension_numbers<[1], [0], [0], [1], [0, 0, 1, 1], [], []>} : vector<1x32xbf16>, vector<32x128xbf16>, vector<1x128xf32> -> vector<1x128xf32>
    %39 = arith.addf %36, %38 : vector<1x128xf32>
    %40 = arith.mulf %39, %13 : vector<1x128xf32>
    %41 = math.tanh %40 : vector<1x128xf32>
    %42 = arith.mulf %41, %13 : vector<1x128xf32>
    %43 = arith.addf %42, %16 : vector<1x128xf32>
    %44 = vector.extract_strided_slice %43 {offsets = [0, 0], sizes = [1, 32], strides = [1, 1]} : vector<1x128xf32> to vector<1x32xf32>
    %45 = vector.extract_strided_slice %43 {offsets = [0, 32], sizes = [1, 32], strides = [1, 1]} : vector<1x128xf32> to vector<1x32xf32>
    %46 = vector.extract_strided_slice %43 {offsets = [0, 64], sizes = [1, 32], strides = [1, 1]} : vector<1x128xf32> to vector<1x32xf32>
    %47 = vector.extract_strided_slice %43 {offsets = [0, 96], sizes = [1, 32], strides = [1, 1]} : vector<1x128xf32> to vector<1x32xf32>
    %48 = arith.mulf %45, %33 : vector<1x32xf32>
    %49 = arith.mulf %44, %47 : vector<1x32xf32>
    %50 = arith.addf %48, %49 : vector<1x32xf32>
    %51 = math.tanh %50 : vector<1x32xf32>
    %52 = arith.mulf %46, %51 : vector<1x32xf32>
    %53 = vector.extract_strided_slice %6 {offsets = [2, 0], sizes = [1, 128], strides = [1, 1]} : vector<8x128xf32> to vector<1x128xf32>
    %54 = arith.truncf %52 : vector<1x32xf32> to vector<1x32xbf16>
    %cst_15 = arith.constant dense<0.000000e+00> : vector<1x128xf32>
    %55 = tpu.matmul %54, %7, %cst_15 {dimension_numbers = #tpu.dot_dimension_numbers<[1], [0], [0], [1], [0, 0, 1, 1], [], []>} : vector<1x32xbf16>, vector<32x128xbf16>, vector<1x128xf32> -> vector<1x128xf32>
    %56 = arith.addf %53, %55 : vector<1x128xf32>
    %57 = arith.mulf %56, %13 : vector<1x128xf32>
    %58 = math.tanh %57 : vector<1x128xf32>
    %59 = arith.mulf %58, %13 : vector<1x128xf32>
    %60 = arith.addf %59, %16 : vector<1x128xf32>
    %61 = vector.extract_strided_slice %60 {offsets = [0, 0], sizes = [1, 32], strides = [1, 1]} : vector<1x128xf32> to vector<1x32xf32>
    %62 = vector.extract_strided_slice %60 {offsets = [0, 32], sizes = [1, 32], strides = [1, 1]} : vector<1x128xf32> to vector<1x32xf32>
    %63 = vector.extract_strided_slice %60 {offsets = [0, 64], sizes = [1, 32], strides = [1, 1]} : vector<1x128xf32> to vector<1x32xf32>
    %64 = vector.extract_strided_slice %60 {offsets = [0, 96], sizes = [1, 32], strides = [1, 1]} : vector<1x128xf32> to vector<1x32xf32>
    %65 = arith.mulf %62, %50 : vector<1x32xf32>
    %66 = arith.mulf %61, %64 : vector<1x32xf32>
    %67 = arith.addf %65, %66 : vector<1x32xf32>
    %68 = math.tanh %67 : vector<1x32xf32>
    %69 = arith.mulf %63, %68 : vector<1x32xf32>
    %70 = vector.extract_strided_slice %6 {offsets = [3, 0], sizes = [1, 128], strides = [1, 1]} : vector<8x128xf32> to vector<1x128xf32>
    %71 = arith.truncf %69 : vector<1x32xf32> to vector<1x32xbf16>
    %cst_16 = arith.constant dense<0.000000e+00> : vector<1x128xf32>
    %72 = tpu.matmul %71, %7, %cst_16 {dimension_numbers = #tpu.dot_dimension_numbers<[1], [0], [0], [1], [0, 0, 1, 1], [], []>} : vector<1x32xbf16>, vector<32x128xbf16>, vector<1x128xf32> -> vector<1x128xf32>
    %73 = arith.addf %70, %72 : vector<1x128xf32>
    %74 = arith.mulf %73, %13 : vector<1x128xf32>
    %75 = math.tanh %74 : vector<1x128xf32>
    %76 = arith.mulf %75, %13 : vector<1x128xf32>
    %77 = arith.addf %76, %16 : vector<1x128xf32>
    %78 = vector.extract_strided_slice %77 {offsets = [0, 0], sizes = [1, 32], strides = [1, 1]} : vector<1x128xf32> to vector<1x32xf32>
    %79 = vector.extract_strided_slice %77 {offsets = [0, 32], sizes = [1, 32], strides = [1, 1]} : vector<1x128xf32> to vector<1x32xf32>
    %80 = vector.extract_strided_slice %77 {offsets = [0, 64], sizes = [1, 32], strides = [1, 1]} : vector<1x128xf32> to vector<1x32xf32>
    %81 = vector.extract_strided_slice %77 {offsets = [0, 96], sizes = [1, 32], strides = [1, 1]} : vector<1x128xf32> to vector<1x32xf32>
    %82 = arith.mulf %79, %67 : vector<1x32xf32>
    %83 = arith.mulf %78, %81 : vector<1x32xf32>
    %84 = arith.addf %82, %83 : vector<1x32xf32>
    %85 = math.tanh %84 : vector<1x32xf32>
    %86 = arith.mulf %80, %85 : vector<1x32xf32>
    %87 = vector.extract_strided_slice %6 {offsets = [4, 0], sizes = [1, 128], strides = [1, 1]} : vector<8x128xf32> to vector<1x128xf32>
    %88 = arith.truncf %86 : vector<1x32xf32> to vector<1x32xbf16>
    %cst_17 = arith.constant dense<0.000000e+00> : vector<1x128xf32>
    %89 = tpu.matmul %88, %7, %cst_17 {dimension_numbers = #tpu.dot_dimension_numbers<[1], [0], [0], [1], [0, 0, 1, 1], [], []>} : vector<1x32xbf16>, vector<32x128xbf16>, vector<1x128xf32> -> vector<1x128xf32>
    %90 = arith.addf %87, %89 : vector<1x128xf32>
    %91 = arith.mulf %90, %13 : vector<1x128xf32>
    %92 = math.tanh %91 : vector<1x128xf32>
    %93 = arith.mulf %92, %13 : vector<1x128xf32>
    %94 = arith.addf %93, %16 : vector<1x128xf32>
    %95 = vector.extract_strided_slice %94 {offsets = [0, 0], sizes = [1, 32], strides = [1, 1]} : vector<1x128xf32> to vector<1x32xf32>
    %96 = vector.extract_strided_slice %94 {offsets = [0, 32], sizes = [1, 32], strides = [1, 1]} : vector<1x128xf32> to vector<1x32xf32>
    %97 = vector.extract_strided_slice %94 {offsets = [0, 64], sizes = [1, 32], strides = [1, 1]} : vector<1x128xf32> to vector<1x32xf32>
    %98 = vector.extract_strided_slice %94 {offsets = [0, 96], sizes = [1, 32], strides = [1, 1]} : vector<1x128xf32> to vector<1x32xf32>
    %99 = arith.mulf %96, %84 : vector<1x32xf32>
    %100 = arith.mulf %95, %98 : vector<1x32xf32>
    %101 = arith.addf %99, %100 : vector<1x32xf32>
    %102 = math.tanh %101 : vector<1x32xf32>
    %103 = arith.mulf %97, %102 : vector<1x32xf32>
    %104 = vector.extract_strided_slice %6 {offsets = [5, 0], sizes = [1, 128], strides = [1, 1]} : vector<8x128xf32> to vector<1x128xf32>
    %105 = arith.truncf %103 : vector<1x32xf32> to vector<1x32xbf16>
    %cst_18 = arith.constant dense<0.000000e+00> : vector<1x128xf32>
    %106 = tpu.matmul %105, %7, %cst_18 {dimension_numbers = #tpu.dot_dimension_numbers<[1], [0], [0], [1], [0, 0, 1, 1], [], []>} : vector<1x32xbf16>, vector<32x128xbf16>, vector<1x128xf32> -> vector<1x128xf32>
    %107 = arith.addf %104, %106 : vector<1x128xf32>
    %108 = arith.mulf %107, %13 : vector<1x128xf32>
    %109 = math.tanh %108 : vector<1x128xf32>
    %110 = arith.mulf %109, %13 : vector<1x128xf32>
    %111 = arith.addf %110, %16 : vector<1x128xf32>
    %112 = vector.extract_strided_slice %111 {offsets = [0, 0], sizes = [1, 32], strides = [1, 1]} : vector<1x128xf32> to vector<1x32xf32>
    %113 = vector.extract_strided_slice %111 {offsets = [0, 32], sizes = [1, 32], strides = [1, 1]} : vector<1x128xf32> to vector<1x32xf32>
    %114 = vector.extract_strided_slice %111 {offsets = [0, 64], sizes = [1, 32], strides = [1, 1]} : vector<1x128xf32> to vector<1x32xf32>
    %115 = vector.extract_strided_slice %111 {offsets = [0, 96], sizes = [1, 32], strides = [1, 1]} : vector<1x128xf32> to vector<1x32xf32>
    %116 = arith.mulf %113, %101 : vector<1x32xf32>
    %117 = arith.mulf %112, %115 : vector<1x32xf32>
    %118 = arith.addf %116, %117 : vector<1x32xf32>
    %119 = math.tanh %118 : vector<1x32xf32>
    %120 = arith.mulf %114, %119 : vector<1x32xf32>
    %121 = vector.extract_strided_slice %6 {offsets = [6, 0], sizes = [1, 128], strides = [1, 1]} : vector<8x128xf32> to vector<1x128xf32>
    %122 = arith.truncf %120 : vector<1x32xf32> to vector<1x32xbf16>
    %cst_19 = arith.constant dense<0.000000e+00> : vector<1x128xf32>
    %123 = tpu.matmul %122, %7, %cst_19 {dimension_numbers = #tpu.dot_dimension_numbers<[1], [0], [0], [1], [0, 0, 1, 1], [], []>} : vector<1x32xbf16>, vector<32x128xbf16>, vector<1x128xf32> -> vector<1x128xf32>
    %124 = arith.addf %121, %123 : vector<1x128xf32>
    %125 = arith.mulf %124, %13 : vector<1x128xf32>
    %126 = math.tanh %125 : vector<1x128xf32>
    %127 = arith.mulf %126, %13 : vector<1x128xf32>
    %128 = arith.addf %127, %16 : vector<1x128xf32>
    %129 = vector.extract_strided_slice %128 {offsets = [0, 0], sizes = [1, 32], strides = [1, 1]} : vector<1x128xf32> to vector<1x32xf32>
    %130 = vector.extract_strided_slice %128 {offsets = [0, 32], sizes = [1, 32], strides = [1, 1]} : vector<1x128xf32> to vector<1x32xf32>
    %131 = vector.extract_strided_slice %128 {offsets = [0, 64], sizes = [1, 32], strides = [1, 1]} : vector<1x128xf32> to vector<1x32xf32>
    %132 = vector.extract_strided_slice %128 {offsets = [0, 96], sizes = [1, 32], strides = [1, 1]} : vector<1x128xf32> to vector<1x32xf32>
    %133 = arith.mulf %130, %118 : vector<1x32xf32>
    %134 = arith.mulf %129, %132 : vector<1x32xf32>
    %135 = arith.addf %133, %134 : vector<1x32xf32>
    %136 = math.tanh %135 : vector<1x32xf32>
    %137 = arith.mulf %131, %136 : vector<1x32xf32>
    %138 = vector.extract_strided_slice %6 {offsets = [7, 0], sizes = [1, 128], strides = [1, 1]} : vector<8x128xf32> to vector<1x128xf32>
    %139 = arith.truncf %137 : vector<1x32xf32> to vector<1x32xbf16>
    %cst_20 = arith.constant dense<0.000000e+00> : vector<1x128xf32>
    %140 = tpu.matmul %139, %7, %cst_20 {dimension_numbers = #tpu.dot_dimension_numbers<[1], [0], [0], [1], [0, 0, 1, 1], [], []>} : vector<1x32xbf16>, vector<32x128xbf16>, vector<1x128xf32> -> vector<1x128xf32>
    %141 = arith.addf %138, %140 : vector<1x128xf32>
    %142 = arith.mulf %141, %13 : vector<1x128xf32>
    %143 = math.tanh %142 : vector<1x128xf32>
    %144 = arith.mulf %143, %13 : vector<1x128xf32>
    %145 = arith.addf %144, %16 : vector<1x128xf32>
    %146 = vector.extract_strided_slice %145 {offsets = [0, 0], sizes = [1, 32], strides = [1, 1]} : vector<1x128xf32> to vector<1x32xf32>
    %147 = vector.extract_strided_slice %145 {offsets = [0, 32], sizes = [1, 32], strides = [1, 1]} : vector<1x128xf32> to vector<1x32xf32>
    %148 = vector.extract_strided_slice %145 {offsets = [0, 64], sizes = [1, 32], strides = [1, 1]} : vector<1x128xf32> to vector<1x32xf32>
    %149 = vector.extract_strided_slice %145 {offsets = [0, 96], sizes = [1, 32], strides = [1, 1]} : vector<1x128xf32> to vector<1x32xf32>
    %150 = arith.mulf %147, %135 : vector<1x32xf32>
    %151 = arith.mulf %146, %149 : vector<1x32xf32>
    %152 = arith.addf %150, %151 : vector<1x32xf32>
    %153 = math.tanh %152 : vector<1x32xf32>
    %154 = arith.mulf %148, %153 : vector<1x32xf32>
    %155 = arith.truncf %154 : vector<1x32xf32> to vector<1x32xbf16>
    %c0_21 = arith.constant 0 : index
    %c0_22 = arith.constant 0 : index
    %156 = vector.load %arg4[%c0_21, %c0_22] : memref<32x16xbf16, #tpu.memory_space<vmem>>, vector<32x16xbf16>
    %cst_23 = arith.constant dense<0.000000e+00> : vector<1x16xf32>
    %157 = tpu.matmul %155, %156, %cst_23 {dimension_numbers = #tpu.dot_dimension_numbers<[1], [0], [0], [1], [0, 0, 1, 1], [], []>} : vector<1x32xbf16>, vector<32x16xbf16>, vector<1x16xf32> -> vector<1x16xf32>
    %c0_24 = arith.constant 0 : index
    %c0_25 = arith.constant 0 : index
    %158 = vector.load %arg5[%c0_24, %c0_25] : memref<1x16xf32, #tpu.memory_space<vmem>>, vector<1x16xf32>
    %159 = arith.addf %157, %158 : vector<1x16xf32>
    %160 = vector.extract_strided_slice %159 {offsets = [0, 0], sizes = [1, 8], strides = [1, 1]} : vector<1x16xf32> to vector<1x8xf32>
    %161 = vector.extract_strided_slice %159 {offsets = [0, 8], sizes = [1, 8], strides = [1, 1]} : vector<1x16xf32> to vector<1x8xf32>
    %cst_26 = arith.constant -3.000000e+01 : f32
    %cst_27 = arith.constant 3.000000e+01 : f32
    %162 = vector.broadcast %cst_26 : f32 to vector<1x8xf32>
    %163 = arith.maximumf %162, %161 : vector<1x8xf32>
    %164 = vector.broadcast %cst_27 : f32 to vector<1x8xf32>
    %165 = arith.minimumf %164, %163 : vector<1x8xf32>
    %166 = math.exp %165 : vector<1x8xf32>
    %c0_28 = arith.constant 0 : index
    %c0_29 = arith.constant 0 : index
    %167 = vector.load %arg6[%c0_28, %c0_29] : memref<1x8xf32, #tpu.memory_space<vmem>>, vector<1x8xf32>
    %168 = arith.mulf %166, %167 : vector<1x8xf32>
    %169 = arith.addf %160, %168 : vector<1x8xf32>
    %c0_30 = arith.constant 0 : index
    %c0_31 = arith.constant 0 : index
    %170 = vector.load %arg7[%c0_30, %c0_31] : memref<1x8xf32, #tpu.memory_space<vmem>>, vector<1x8xf32>
    tpu.vector_store %arg7[%c0_30, %c0_31], %169 {strides = array<i32>} : memref<1x8xf32, #tpu.memory_space<vmem>>, vector<1x8xf32>,
    return
  }
}

</mosaic_0001>

<llo_original>
// kernel: tpu_custom_call.1
$region0: #{tpu_custom_call.1}
  #allocation0 [shape = 'u32[]', space=smem, size = 0x4, offset = 0x4, fixed_abs, tag = 'smem constant byte address 0x4 - core index']
  #allocation1 [shape = 'u32[144,128]{1,0:T(1,128)}', space=vmem, size = 0x12000, scoped, tag = 'internal scratch']
  %s0 = inlined_call_operand.vmem [shape: f32[8,8], index: 0, kind: input, shape index: {}]
  %s1 = inlined_call_operand.vmem [shape: bf16[8,128], index: 1, kind: input, shape index: {}]
  %s2 = inlined_call_operand.vmem [shape: bf16[32,128], index: 2, kind: input, shape index: {}]
  %s3 = inlined_call_operand.vmem [shape: f32[1,128], index: 3, kind: input, shape index: {}]
  %s4 = inlined_call_operand.vmem [shape: bf16[32,16], index: 4, kind: input, shape index: {}]
  %s5 = inlined_call_operand.vmem [shape: f32[1,16], index: 5, kind: input, shape index: {}]
  %s6 = inlined_call_operand.vmem [shape: f32[1,8], index: 6, kind: input, shape index: {}]
  %s7 = inlined_call_operand.hbm [shape: f32[1,8], index: 7, kind: output, shape index: {}]
  %s8 = sld [smem:[#allocation0]]
  $region38: #{tpu_custom_call.1} parent=0
    _
  %s10 = ssub.s32 1, %s8
  %s11 = scalar_select 0, %s10, %s8
  $region1: #{tpu_custom_call.1} parent=0
    #allocation2 [shape = 'u8[512]{0}', space=vmem, size = 0x400, scoped, tag = 'output window, operand 0, single buffered']
    #allocation3 [shape = 's32[1]{0}', space=sflag, size = 0x4, scoped, tag = 'scoped memory for tpu_custom_call.1']
    %12 = vsyncpa [#allocation3], 0
    // Predicated region
    $region2: #{tpu_custom_call.1} parent=1 // pred_check
      _
    $region3: #{tpu_custom_call.1} parent=1 // pred_check_branch
      %14 = sbr.rel (0) target = $region5
    $region4: #{tpu_custom_call.1} parent=1 // pred_region
      _
    $region5: #{tpu_custom_call.1} parent=1 // pred_fallthru
      _
    // Predicated region
    $region6: #{tpu_custom_call.1} parent=1 // pred_check
      _
    $region7: #{tpu_custom_call.1} parent=1 // pred_check_branch
      %16 = sbr.rel (0) target = $region9
    $region8: #{tpu_custom_call.1} parent=1 // pred_region
      _
    $region9: #{tpu_custom_call.1} parent=1 // pred_fallthru
      _
    // Predicated region
    $region10: #{tpu_custom_call.1} parent=1 // pred_check
      _
    $region11: #{tpu_custom_call.1} parent=1 // pred_check_branch
      %18 = sbr.rel (0) target = $region13
    $region12: #{tpu_custom_call.1} parent=1 // pred_region
      _
    $region13: #{tpu_custom_call.1} parent=1 // pred_fallthru
      _
    // Predicated region
    $region14: #{tpu_custom_call.1} parent=1 // pred_check
      _
    $region15: #{tpu_custom_call.1} parent=1 // pred_check_branch
      %20 = sbr.rel (0) target = $region17
    $region16: #{tpu_custom_call.1} parent=1 // pred_region
      _
    $region17: #{tpu_custom_call.1} parent=1 // pred_fallthru
      _
    // Predicated region
    $region18: #{tpu_custom_call.1} parent=1 // pred_check
      _
    $region19: #{tpu_custom_call.1} parent=1 // pred_check_branch
      %22 = sbr.rel (0) target = $region21
    $region20: #{tpu_custom_call.1} parent=1 // pred_region
      _
    $region21: #{tpu_custom_call.1} parent=1 // pred_fallthru
      _
    // Predicated region
    $region22: #{tpu_custom_call.1} parent=1 // pred_check
      _
    $region23: #{tpu_custom_call.1} parent=1 // pred_check_branch
      %24 = sbr.rel (0) target = $region25
    $region24: #{tpu_custom_call.1} parent=1 // pred_region
      _
    $region25: #{tpu_custom_call.1} parent=1 // pred_fallthru
      _
    // Predicated region
    $region26: #{tpu_custom_call.1} parent=1 // pred_check
      _
    $region27: #{tpu_custom_call.1} parent=1 // pred_check_branch
      %26 = sbr.rel (0) target = $region29
    $region28: #{tpu_custom_call.1} parent=1 // pred_region
      _
    $region29: #{tpu_custom_call.1} parent=1 // pred_fallthru
      _
    %v28 = vld [vmem:[%s0] sm:$0xff]
    %v29 = vpack.c.bf16 %v28, %v28
    %v30 = vld [vmem:[%s1] sm:$0xf]
    %v31 = vld [vmem:[%s3] sm:$0x1]
    %v33 = vlaneseq
    %v34 = vshrl.u32 %v33, 7
    %v35 = vsub.s32 0, %v34
    %v36 = vrot.slane %v31, %v35
    %vm38 = vcmask 64512
    %v40 = vsel %vm38, %v29, 0
    %vm42 = vcmask 1043456
    %v44 = vsel %vm42, %v30, 0
    %46 = vmatprep.subr.bf16.mxu0 0
    %47 = vmatpush1.bf16.msra.mxu0 %v44
    %48 = vmatprep.subr.bf16.mxu0 0
    %49 = vmatpush1.bf16.msra.mxu0 0
    %50 = vmatprep.subr.bf16.mxu0 0
    %51 = vmatpush1.bf16.msra.mxu0 0
    %52 = vmatprep.subr.bf16.mxu0 0
    %53 = vmatpush1.bf16.msra.mxu0 0
    %54 = vmatprep.subr.bf16.mxu0 0
    %55 = vmatpush1.bf16.msra.mxu0 0
    %56 = vmatprep.subr.bf16.mxu0 0
    %57 = vmatpush1.bf16.msra.mxu0 0
    %58 = vmatprep.subr.bf16.mxu0 0
    %59 = vmatpush1.bf16.msra.mxu0 0
    %60 = vmatprep.subr.bf16.mxu0 0
    %61 = vmatpush1.bf16.msra.mxu0 0
    %62 = vmatprep.subr.bf16.mxu0 0
    %63 = vmatpush1.bf16.msra.mxu0 0
    %64 = vmatprep.subr.bf16.mxu0 0
    %65 = vmatpush1.bf16.msra.mxu0 0
    %66 = vmatprep.subr.bf16.mxu0 0
    %67 = vmatpush1.bf16.msra.mxu0 0
    %68 = vmatprep.subr.bf16.mxu0 0
    %69 = vmatpush1.bf16.msra.mxu0 0
    %70 = vmatprep.subr.bf16.mxu0 0
    %71 = vmatpush1.bf16.msra.mxu0 0
    %72 = vmatprep.subr.bf16.mxu0 0
    %73 = vmatpush1.bf16.msra.mxu0 0
    %74 = vmatprep.subr.bf16.mxu0 0
    %75 = vmatpush1.bf16.msra.mxu0 0
    %76 = vmatprep.subr.bf16.mxu0 0
    %77 = vmatpush1.bf16.msra.mxu0 0
    %78 = vmatprep.mubr.bf16.mxu0 0
    %79 = vmatmul.mubr.bf16.gmra.mrb[0].mxu0 %v40
    %v80 = vpop.f32.mrb[0].mxu0
    %v81 = vadd.f32 %v36, %v80
    %v82 = vpop.f32.mrb[0].mxu0
    %v83 = vpop.f32.mrb[0].mxu0
    %v84 = vpop.f32.mrb[0].mxu0
    %85 = vdwg.mxu0
    %v86 = vld [vmem:[%s2] sm:$0xf]
    %v87 = vld [vmem:[%s2 + $0x4] sm:$0xf]
    %v88 = vld [vmem:[%s2 + $0x8] sm:$0xf]
    %v89 = vld [vmem:[%s2 + $0xc] sm:$0xf]
    %v90 = vlaneseq
    %v91 = vand.u32 %v90, 127
    %vm92 = vcmp.lt.s32.totalorder %v91, 96
    %v93 = vsel %vm92, 0.5, 1.0
    %v94 = vsel %vm92, 0.5, 0.0
    %v99 = vunpack.c.l.b16 %v86
    %v100 = vunpack.c.l.b16 %v87
    %v101 = vunpack.c.l.b16 %v88
    %v102 = vunpack.c.l.b16 %v89
    %v103 = vpack.c.b16 %v100, %v99
    %v104 = vpack.c.b16 %v102, %v101
    %vm107 = vcmask 261120
    %v109 = vsel %vm107, 0, 0
    %111 = vmatprep.subr.bf16.mxu0 0
    %112 = vmatpush1.bf16.msra.mxu0 %v103
    %113 = vmatprep.subr.bf16.mxu0 0
    %114 = vmatpush1.bf16.msra.mxu0 %v104
    %115 = vmatprep.subr.bf16.mxu0 0
    %116 = vmatpush1.bf16.msra.mxu0 0
    %117 = vmatprep.subr.bf16.mxu0 0
    %118 = vmatpush1.bf16.msra.mxu0 0
    %119 = vmatprep.subr.bf16.mxu0 0
    %120 = vmatpush1.bf16.msra.mxu0 0
    %121 = vmatprep.subr.bf16.mxu0 0
    %122 = vmatpush1.bf16.msra.mxu0 0
    %123 = vmatprep.subr.bf16.mxu0 0
    %124 = vmatpush1.bf16.msra.mxu0 0
    %125 = vmatprep.subr.bf16.mxu0 0
    %126 = vmatpush1.bf16.msra.mxu0 0
    %127 = vmatprep.subr.bf16.mxu0 0
    %128 = vmatpush1.bf16.msra.mxu0 0
    %129 = vmatprep.subr.bf16.mxu0 0
    %130 = vmatpush1.bf16.msra.mxu0 0
    %131 = vmatprep.subr.bf16.mxu0 0
    %132 = vmatpush1.bf16.msra.mxu0 0
    %133 = vmatprep.subr.bf16.mxu0 0
    %134 = vmatpush1.bf16.msra.mxu0 0
    %135 = vmatprep.subr.bf16.mxu0 0
    %136 = vmatpush1.bf16.msra.mxu0 0
    %137 = vmatprep.subr.bf16.mxu0 0
    %138 = vmatpush1.bf16.msra.mxu0 0
    %139 = vmatprep.subr.bf16.mxu0 0
    %140 = vmatpush1.bf16.msra.mxu0 0
    %141 = vmatprep.subr.bf16.mxu0 0
    %142 = vmatpush1.bf16.msra.mxu0 0
    %143 = vmatprep.mubr.bf16.mxu0 0
    %144 = vmatmul.mubr.bf16.gmra.mrb[0].mxu0 %v109
    %v145 = vpop.f32.mrb[0].mxu0
    %v146 = vadd.f32 0.0, %v145
    %v147 = vpop.f32.mrb[0].mxu0
    %v148 = vpop.f32.mrb[0].mxu0
    %v149 = vpop.f32.mrb[0].mxu0
    %150 = vdwg.mxu0
    %v151 = vadd.f32 %v81, %v146
    %v152 = vmul.f32 %v151, %v93
    %v153 = vtanh.pop %v152
    %v154 = vmul.f32 %v153, %v93
    %v155 = vadd.f32 %v154, %v94
    %v156 = vmul.f32 %v155, 0.0
    %158 = vrot.lane.b32.xlu0 %v155, 32
    %v159 = vpop.permute.xlu0 %158
    %v161 = vmul.f32 %v155, %v159
    %163 = vrot.lane.b32.xlu0 %v161, 32
    %v164 = vpop.permute.xlu0 %163
    %v166 = vadd.f32 %v156, %v164
    %v167 = vtanh.pop %v166
    %169 = vrot.lane.b32.xlu0 %v167, 32
    %v170 = vpop.permute.xlu0 %169
    %v172 = vmul.f32 %v155, %v170
    %v173 = vpack.c.bf16 %v172, %v172
    %175 = vrot.lane.b32.xlu0 %v173, 64
    %v176 = vpop.permute.xlu0 %175
    %v178 = vsel %vm107, %v176, 0
    %180 = vmatprep.subr.bf16.mxu0 0
    %181 = vmatpush1.bf16.msra.mxu0 %v103
    %182 = vmatprep.subr.bf16.mxu0 0
    %183 = vmatpush1.bf16.msra.mxu0 %v104
    %184 = vmatprep.subr.bf16.mxu0 0
    %185 = vmatpush1.bf16.msra.mxu0 0
    %186 = vmatprep.subr.bf16.mxu0 0
    %187 = vmatpush1.bf16.msra.mxu0 0
    %188 = vmatprep.subr.bf16.mxu0 0
    %189 = vmatpush1.bf16.msra.mxu0 0
    %190 = vmatprep.subr.bf16.mxu0 0
    %191 = vmatpush1.bf16.msra.mxu0 0
    %192 = vmatprep.subr.bf16.mxu0 0
    %193 = vmatpush1.bf16.msra.mxu0 0
    %194 = vmatprep.subr.bf16.mxu0 0
    %195 = vmatpush1.bf16.msra.mxu0 0
    %196 = vmatprep.subr.bf16.mxu0 0
    %197 = vmatpush1.bf16.msra.mxu0 0
    %198 = vmatprep.subr.bf16.mxu0 0
    %199 = vmatpush1.bf16.msra.mxu0 0
    %200 = vmatprep.subr.bf16.mxu0 0
    %201 = vmatpush1.bf16.msra.mxu0 0
    %202 = vmatprep.subr.bf16.mxu0 0
    %203 = vmatpush1.bf16.msra.mxu0 0
    %204 = vmatprep.subr.bf16.mxu0 0
    %205 = vmatpush1.bf16.msra.mxu0 0
    %206 = vmatprep.subr.bf16.mxu0 0
    %207 = vmatpush1.bf16.msra.mxu0 0
    %208 = vmatprep.subr.bf16.mxu0 0
    %209 = vmatpush1.bf16.msra.mxu0 0
    %210 = vmatprep.subr.bf16.mxu0 0
    %211 = vmatpush1.bf16.msra.mxu0 0
    %212 = vmatprep.mubr.bf16.mxu0 0
    %213 = vmatmul.mubr.bf16.gmra.mrb[0].mxu0 %v178
    %v214 = vpop.f32.mrb[0].mxu0
    %v215 = vadd.f32 0.0, %v214
    %v216 = vpop.f32.mrb[0].mxu0
    %v217 = vpop.f32.mrb[0].mxu0
    %v218 = vpop.f32.mrb[0].mxu0
    %219 = vdwg.mxu0
    %v221 = vrot.slane %v215, 7
    %v223 = vadd.f32 %v81, %v221
    %v224 = vmul.f32 %v223, %v93
    %v225 = vtanh.pop %v224
    %v226 = vmul.f32 %v225, %v93
    %v227 = vadd.f32 %v226, %v94
    %v229 = vrot.slane %v166, 7
    %v231 = vmul.f32 %v227, %v229
    %233 = vrot.lane.b32.xlu0 %v227, 32
    %v234 = vpop.permute.xlu0 %233
    %v236 = vmul.f32 %v227, %v234
    %238 = vrot.lane.b32.xlu0 %v236, 32
    %v239 = vpop.permute.xlu0 %238
    %v241 = vadd.f32 %v231, %v239
    %v242 = vtanh.pop %v241
    %244 = vrot.lane.b32.xlu0 %v242, 32
    %v245 = vpop.permute.xlu0 %244
    %v247 = vmul.f32 %v227, %v245
    %v248 = vpack.c.bf16 %v247, %v247
    %v250 = vshrl.u32 %v248, 16
    %252 = vrot.lane.b32.xlu0 %v250, 64
    %v253 = vpop.permute.xlu0 %252
    %v255 = vsel %vm107, %v253, 0
    %257 = vmatprep.subr.bf16.mxu0 0
    %258 = vmatpush1.bf16.msra.mxu0 %v103
    %259 = vmatprep.subr.bf16.mxu0 0
    %260 = vmatpush1.bf16.msra.mxu0 %v104
    %261 = vmatprep.subr.bf16.mxu0 0
    %262 = vmatpush1.bf16.msra.mxu0 0
    %263 = vmatprep.subr.bf16.mxu0 0
    %264 = vmatpush1.bf16.msra.mxu0 0
    %265 = vmatprep.subr.bf16.mxu0 0
    %266 = vmatpush1.bf16.msra.mxu0 0
    %267 = vmatprep.subr.bf16.mxu0 0
    %268 = vmatpush1.bf16.msra.mxu0 0
    %269 = vmatprep.subr.bf16.mxu0 0
    %270 = vmatpush1.bf16.msra.mxu0 0
    %271 = vmatprep.subr.bf16.mxu0 0
    %272 = vmatpush1.bf16.msra.mxu0 0
    %273 = vmatprep.subr.bf16.mxu0 0
    %274 = vmatpush1.bf16.msra.mxu0 0
    %275 = vmatprep.subr.bf16.mxu0 0
    %276 = vmatpush1.bf16.msra.mxu0 0
    %277 = vmatprep.subr.bf16.mxu0 0
    %278 = vmatpush1.bf16.msra.mxu0 0
    %279 = vmatprep.subr.bf16.mxu0 0
    %280 = vmatpush1.bf16.msra.mxu0 0
    %281 = vmatprep.subr.bf16.mxu0 0
    %282 = vmatpush1.bf16.msra.mxu0 0
    %283 = vmatprep.subr.bf16.mxu0 0
    %284 = vmatpush1.bf16.msra.mxu0 0
    %285 = vmatprep.subr.bf16.mxu0 0
    %286 = vmatpush1.bf16.msra.mxu0 0
    %287 = vmatprep.subr.bf16.mxu0 0
    %288 = vmatpush1.bf16.msra.mxu0 0
    %289 = vmatprep.mubr.bf16.mxu0 0
    %290 = vmatmul.mubr.bf16.gmra.mrb[0].mxu0 %v255
    %v291 = vpop.f32.mrb[0].mxu0
    %v292 = vadd.f32 0.0, %v291
    %v293 = vpop.f32.mrb[0].mxu0
    %v294 = vpop.f32.mrb[0].mxu0
    %v295 = vpop.f32.mrb[0].mxu0
    %296 = vdwg.mxu0
    %v298 = vrot.slane %v292, 6
    %v300 = vadd.f32 %v81, %v298
    %v301 = vmul.f32 %v300, %v93
    %v302 = vtanh.pop %v301
    %v303 = vmul.f32 %v302, %v93
    %v304 = vadd.f32 %v303, %v94
    %v306 = vrot.slane %v241, 7
    %v308 = vmul.f32 %v304, %v306
    %310 = vrot.lane.b32.xlu0 %v304, 32
    %v311 = vpop.permute.xlu0 %310
    %v313 = vmul.f32 %v304, %v311
    %315 = vrot.lane.b32.xlu0 %v313, 32
    %v316 = vpop.permute.xlu0 %315
    %v318 = vadd.f32 %v308, %v316
    %v319 = vtanh.pop %v318
    %321 = vrot.lane.b32.xlu0 %v319, 32
    %v322 = vpop.permute.xlu0 %321
    %v324 = vmul.f32 %v304, %v322
    %v325 = vpack.c.bf16 %v324, %v324
    %v327 = vrot.slane %v325, 1
    %328 = vrot.lane.b32.xlu0 %v327, 64
    %v329 = vpop.permute.xlu0 %328
    %v331 = vsel %vm107, %v329, 0
    %333 = vmatprep.subr.bf16.mxu0 0
    %334 = vmatpush1.bf16.msra.mxu0 %v103
    %335 = vmatprep.subr.bf16.mxu0 0
    %336 = vmatpush1.bf16.msra.mxu0 %v104
    %337 = vmatprep.subr.bf16.mxu0 0
    %338 = vmatpush1.bf16.msra.mxu0 0
    %339 = vmatprep.subr.bf16.mxu0 0
    %340 = vmatpush1.bf16.msra.mxu0 0
    %341 = vmatprep.subr.bf16.mxu0 0
    %342 = vmatpush1.bf16.msra.mxu0 0
    %343 = vmatprep.subr.bf16.mxu0 0
    %344 = vmatpush1.bf16.msra.mxu0 0
    %345 = vmatprep.subr.bf16.mxu0 0
    %346 = vmatpush1.bf16.msra.mxu0 0
    %347 = vmatprep.subr.bf16.mxu0 0
    %348 = vmatpush1.bf16.msra.mxu0 0
    %349 = vmatprep.subr.bf16.mxu0 0
    %350 = vmatpush1.bf16.msra.mxu0 0
    %351 = vmatprep.subr.bf16.mxu0 0
    %352 = vmatpush1.bf16.msra.mxu0 0
    %353 = vmatprep.subr.bf16.mxu0 0
    %354 = vmatpush1.bf16.msra.mxu0 0
    %355 = vmatprep.subr.bf16.mxu0 0
    %356 = vmatpush1.bf16.msra.mxu0 0
    %357 = vmatprep.subr.bf16.mxu0 0
    %358 = vmatpush1.bf16.msra.mxu0 0
    %359 = vmatprep.subr.bf16.mxu0 0
    %360 = vmatpush1.bf16.msra.mxu0 0
    %361 = vmatprep.subr.bf16.mxu0 0
    %362 = vmatpush1.bf16.msra.mxu0 0
    %363 = vmatprep.subr.bf16.mxu0 0
    %364 = vmatpush1.bf16.msra.mxu0 0
    %365 = vmatprep.mubr.bf16.mxu0 0
    %366 = vmatmul.mubr.bf16.gmra.mrb[0].mxu0 %v331
    %v367 = vpop.f32.mrb[0].mxu0
    %v368 = vadd.f32 0.0, %v367
    %v369 = vpop.f32.mrb[0].mxu0
    %v370 = vpop.f32.mrb[0].mxu0
    %v371 = vpop.f32.mrb[0].mxu0
    %372 = vdwg.mxu0
    %v374 = vrot.slane %v368, 5
    %v376 = vadd.f32 %v81, %v374
    %v377 = vmul.f32 %v376, %v93
    %v378 = vtanh.pop %v377
    %v379 = vmul.f32 %v378, %v93
    %v380 = vadd.f32 %v379, %v94
    %v382 = vrot.slane %v318, 7
    %v384 = vmul.f32 %v380, %v382
    %386 = vrot.lane.b32.xlu0 %v380, 32
    %v387 = vpop.permute.xlu0 %386
    %v389 = vmul.f32 %v380, %v387
    %391 = vrot.lane.b32.xlu0 %v389, 32
    %v392 = vpop.permute.xlu0 %391
    %v394 = vadd.f32 %v384, %v392
    %v395 = vtanh.pop %v394
    %397 = vrot.lane.b32.xlu0 %v395, 32
    %v398 = vpop.permute.xlu0 %397
    %v400 = vmul.f32 %v380, %v398
    %v401 = vpack.c.bf16 %v400, %v400
    %v403 = vshrl.u32 %v401, 16
    %v405 = vrot.slane %v403, 1
    %406 = vrot.lane.b32.xlu0 %v405, 64
    %v407 = vpop.permute.xlu0 %406
    %v409 = vsel %vm107, %v407, 0
    %411 = vmatprep.subr.bf16.mxu0 0
    %412 = vmatpush1.bf16.msra.mxu0 %v103
    %413 = vmatprep.subr.bf16.mxu0 0
    %414 = vmatpush1.bf16.msra.mxu0 %v104
    %415 = vmatprep.subr.bf16.mxu0 0
    %416 = vmatpush1.bf16.msra.mxu0 0
    %417 = vmatprep.subr.bf16.mxu0 0
    %418 = vmatpush1.bf16.msra.mxu0 0
    %419 = vmatprep.subr.bf16.mxu0 0
    %420 = vmatpush1.bf16.msra.mxu0 0
    %421 = vmatprep.subr.bf16.mxu0 0
    %422 = vmatpush1.bf16.msra.mxu0 0
    %423 = vmatprep.subr.bf16.mxu0 0
    %424 = vmatpush1.bf16.msra.mxu0 0
    %425 = vmatprep.subr.bf16.mxu0 0
    %426 = vmatpush1.bf16.msra.mxu0 0
    %427 = vmatprep.subr.bf16.mxu0 0
    %428 = vmatpush1.bf16.msra.mxu0 0
    %429 = vmatprep.subr.bf16.mxu0 0
    %430 = vmatpush1.bf16.msra.mxu0 0
    %431 = vmatprep.subr.bf16.mxu0 0
    %432 = vmatpush1.bf16.msra.mxu0 0
    %433 = vmatprep.subr.bf16.mxu0 0
    %434 = vmatpush1.bf16.msra.mxu0 0
    %435 = vmatprep.subr.bf16.mxu0 0
    %436 = vmatpush1.bf16.msra.mxu0 0
    %437 = vmatprep.subr.bf16.mxu0 0
    %438 = vmatpush1.bf16.msra.mxu0 0
    %439 = vmatprep.subr.bf16.mxu0 0
    %440 = vmatpush1.bf16.msra.mxu0 0
    %441 = vmatprep.subr.bf16.mxu0 0
    %442 = vmatpush1.bf16.msra.mxu0 0
    %443 = vmatprep.mubr.bf16.mxu0 0
    %444 = vmatmul.mubr.bf16.gmra.mrb[0].mxu0 %v409
    %v445 = vpop.f32.mrb[0].mxu0
    %v446 = vadd.f32 0.0, %v445
    %v447 = vpop.f32.mrb[0].mxu0
    %v448 = vpop.f32.mrb[0].mxu0
    %v449 = vpop.f32.mrb[0].mxu0
    %450 = vdwg.mxu0
    %v452 = vrot.slane %v446, 4
    %v454 = vadd.f32 %v81, %v452
    %v455 = vmul.f32 %v454, %v93
    %v456 = vtanh.pop %v455
    %v457 = vmul.f32 %v456, %v93
    %v458 = vadd.f32 %v457, %v94
    %v460 = vrot.slane %v394, 7
    %v462 = vmul.f32 %v458, %v460
    %464 = vrot.lane.b32.xlu0 %v458, 32
    %v465 = vpop.permute.xlu0 %464
    %v467 = vmul.f32 %v458, %v465
    %469 = vrot.lane.b32.xlu0 %v467, 32
    %v470 = vpop.permute.xlu0 %469
    %v472 = vadd.f32 %v462, %v470
    %v473 = vtanh.pop %v472
    %475 = vrot.lane.b32.xlu0 %v473, 32
    %v476 = vpop.permute.xlu0 %475
    %v478 = vmul.f32 %v458, %v476
    %v479 = vpack.c.bf16 %v478, %v478
    %v481 = vrot.slane %v479, 2
    %482 = vrot.lane.b32.xlu0 %v481, 64
    %v483 = vpop.permute.xlu0 %482
    %v485 = vsel %vm107, %v483, 0
    %487 = vmatprep.subr.bf16.mxu0 0
    %488 = vmatpush1.bf16.msra.mxu0 %v103
    %489 = vmatprep.subr.bf16.mxu0 0
    %490 = vmatpush1.bf16.msra.mxu0 %v104
    %491 = vmatprep.subr.bf16.mxu0 0
    %492 = vmatpush1.bf16.msra.mxu0 0
    %493 = vmatprep.subr.bf16.mxu0 0
    %494 = vmatpush1.bf16.msra.mxu0 0
    %495 = vmatprep.subr.bf16.mxu0 0
    %496 = vmatpush1.bf16.msra.mxu0 0
    %497 = vmatprep.subr.bf16.mxu0 0
    %498 = vmatpush1.bf16.msra.mxu0 0
    %499 = vmatprep.subr.bf16.mxu0 0
    %500 = vmatpush1.bf16.msra.mxu0 0
    %501 = vmatprep.subr.bf16.mxu0 0
    %502 = vmatpush1.bf16.msra.mxu0 0
    %503 = vmatprep.subr.bf16.mxu0 0
    %504 = vmatpush1.bf16.msra.mxu0 0
    %505 = vmatprep.subr.bf16.mxu0 0
    %506 = vmatpush1.bf16.msra.mxu0 0
    %507 = vmatprep.subr.bf16.mxu0 0
    %508 = vmatpush1.bf16.msra.mxu0 0
    %509 = vmatprep.subr.bf16.mxu0 0
    %510 = vmatpush1.bf16.msra.mxu0 0
    %511 = vmatprep.subr.bf16.mxu0 0
    %512 = vmatpush1.bf16.msra.mxu0 0
    %513 = vmatprep.subr.bf16.mxu0 0
    %514 = vmatpush1.bf16.msra.mxu0 0
    %515 = vmatprep.subr.bf16.mxu0 0
    %516 = vmatpush1.bf16.msra.mxu0 0
    %517 = vmatprep.subr.bf16.mxu0 0
    %518 = vmatpush1.bf16.msra.mxu0 0
    %519 = vmatprep.mubr.bf16.mxu0 0
    %520 = vmatmul.mubr.bf16.gmra.mrb[0].mxu0 %v485
    %v521 = vpop.f32.mrb[0].mxu0
    %v522 = vadd.f32 0.0, %v521
    %v523 = vpop.f32.mrb[0].mxu0
    %v524 = vpop.f32.mrb[0].mxu0
    %v525 = vpop.f32.mrb[0].mxu0
    %526 = vdwg.mxu0
    %v528 = vrot.slane %v522, 3
    %v530 = vadd.f32 %v81, %v528
    %v531 = vmul.f32 %v530, %v93
    %v532 = vtanh.pop %v531
    %v533 = vmul.f32 %v532, %v93
    %v534 = vadd.f32 %v533, %v94
    %v536 = vrot.slane %v472, 7
    %v538 = vmul.f32 %v534, %v536
    %540 = vrot.lane.b32.xlu0 %v534, 32
    %v541 = vpop.permute.xlu0 %540
    %v543 = vmul.f32 %v534, %v541
    %545 = vrot.lane.b32.xlu0 %v543, 32
    %v546 = vpop.permute.xlu0 %545
    %v548 = vadd.f32 %v538, %v546
    %v549 = vtanh.pop %v548
    %551 = vrot.lane.b32.xlu0 %v549, 32
    %v552 = vpop.permute.xlu0 %551
    %v554 = vmul.f32 %v534, %v552
    %v555 = vpack.c.bf16 %v554, %v554
    %v557 = vshrl.u32 %v555, 16
    %v559 = vrot.slane %v557, 2
    %560 = vrot.lane.b32.xlu0 %v559, 64
    %v561 = vpop.permute.xlu0 %560
    %v563 = vsel %vm107, %v561, 0
    %565 = vmatprep.subr.bf16.mxu0 0
    %566 = vmatpush1.bf16.msra.mxu0 %v103
    %567 = vmatprep.subr.bf16.mxu0 0
    %568 = vmatpush1.bf16.msra.mxu0 %v104
    %569 = vmatprep.subr.bf16.mxu0 0
    %570 = vmatpush1.bf16.msra.mxu0 0
    %571 = vmatprep.subr.bf16.mxu0 0
    %572 = vmatpush1.bf16.msra.mxu0 0
    %573 = vmatprep.subr.bf16.mxu0 0
    %574 = vmatpush1.bf16.msra.mxu0 0
    %575 = vmatprep.subr.bf16.mxu0 0
    %576 = vmatpush1.bf16.msra.mxu0 0
    %577 = vmatprep.subr.bf16.mxu0 0
    %578 = vmatpush1.bf16.msra.mxu0 0
    %579 = vmatprep.subr.bf16.mxu0 0
    %580 = vmatpush1.bf16.msra.mxu0 0
    %581 = vmatprep.subr.bf16.mxu0 0
    %582 = vmatpush1.bf16.msra.mxu0 0
    %583 = vmatprep.subr.bf16.mxu0 0
    %584 = vmatpush1.bf16.msra.mxu0 0
    %585 = vmatprep.subr.bf16.mxu0 0
    %586 = vmatpush1.bf16.msra.mxu0 0
    %587 = vmatprep.subr.bf16.mxu0 0
    %588 = vmatpush1.bf16.msra.mxu0 0
    %589 = vmatprep.subr.bf16.mxu0 0
    %590 = vmatpush1.bf16.msra.mxu0 0
    %591 = vmatprep.subr.bf16.mxu0 0
    %592 = vmatpush1.bf16.msra.mxu0 0
    %593 = vmatprep.subr.bf16.mxu0 0
    %594 = vmatpush1.bf16.msra.mxu0 0
    %595 = vmatprep.subr.bf16.mxu0 0
    %596 = vmatpush1.bf16.msra.mxu0 0
    %597 = vmatprep.mubr.bf16.mxu0 0
    %598 = vmatmul.mubr.bf16.gmra.mrb[0].mxu0 %v563
    %v599 = vpop.f32.mrb[0].mxu0
    %v600 = vadd.f32 0.0, %v599
    %v601 = vpop.f32.mrb[0].mxu0
    %v602 = vpop.f32.mrb[0].mxu0
    %v603 = vpop.f32.mrb[0].mxu0
    %604 = vdwg.mxu0
    %v606 = vrot.slane %v600, 2
    %v608 = vadd.f32 %v81, %v606
    %v609 = vmul.f32 %v608, %v93
    %v610 = vtanh.pop %v609
    %v611 = vmul.f32 %v610, %v93
    %v612 = vadd.f32 %v611, %v94
    %v614 = vrot.slane %v548, 7
    %v616 = vmul.f32 %v612, %v614
    %618 = vrot.lane.b32.xlu0 %v612, 32
    %v619 = vpop.permute.xlu0 %618
    %v621 = vmul.f32 %v612, %v619
    %623 = vrot.lane.b32.xlu0 %v621, 32
    %v624 = vpop.permute.xlu0 %623
    %v626 = vadd.f32 %v616, %v624
    %v627 = vtanh.pop %v626
    %629 = vrot.lane.b32.xlu0 %v627, 32
    %v630 = vpop.permute.xlu0 %629
    %v632 = vmul.f32 %v612, %v630
    %v633 = vpack.c.bf16 %v632, %v632
    %v635 = vrot.slane %v633, 3
    %636 = vrot.lane.b32.xlu0 %v635, 64
    %v637 = vpop.permute.xlu0 %636
    %v639 = vsel %vm107, %v637, 0
    %641 = vmatprep.subr.bf16.mxu0 0
    %642 = vmatpush1.bf16.msra.mxu0 %v103
    %643 = vmatprep.subr.bf16.mxu0 0
    %644 = vmatpush1.bf16.msra.mxu0 %v104
    %645 = vmatprep.subr.bf16.mxu0 0
    %646 = vmatpush1.bf16.msra.mxu0 0
    %647 = vmatprep.subr.bf16.mxu0 0
    %648 = vmatpush1.bf16.msra.mxu0 0
    %649 = vmatprep.subr.bf16.mxu0 0
    %650 = vmatpush1.bf16.msra.mxu0 0
    %651 = vmatprep.subr.bf16.mxu0 0
    %652 = vmatpush1.bf16.msra.mxu0 0
    %653 = vmatprep.subr.bf16.mxu0 0
    %654 = vmatpush1.bf16.msra.mxu0 0
    %655 = vmatprep.subr.bf16.mxu0 0
    %656 = vmatpush1.bf16.msra.mxu0 0
    %657 = vmatprep.subr.bf16.mxu0 0
    %658 = vmatpush1.bf16.msra.mxu0 0
    %659 = vmatprep.subr.bf16.mxu0 0
    %660 = vmatpush1.bf16.msra.mxu0 0
    %661 = vmatprep.subr.bf16.mxu0 0
    %662 = vmatpush1.bf16.msra.mxu0 0
    %663 = vmatprep.subr.bf16.mxu0 0
    %664 = vmatpush1.bf16.msra.mxu0 0
    %665 = vmatprep.subr.bf16.mxu0 0
    %666 = vmatpush1.bf16.msra.mxu0 0
    %667 = vmatprep.subr.bf16.mxu0 0
    %668 = vmatpush1.bf16.msra.mxu0 0
    %669 = vmatprep.subr.bf16.mxu0 0
    %670 = vmatpush1.bf16.msra.mxu0 0
    %671 = vmatprep.subr.bf16.mxu0 0
    %672 = vmatpush1.bf16.msra.mxu0 0
    %673 = vmatprep.mubr.bf16.mxu0 0
    %674 = vmatmul.mubr.bf16.gmra.mrb[0].mxu0 %v639
    %v675 = vpop.f32.mrb[0].mxu0
    %v676 = vadd.f32 0.0, %v675
    %v677 = vpop.f32.mrb[0].mxu0
    %v678 = vpop.f32.mrb[0].mxu0
    %v679 = vpop.f32.mrb[0].mxu0
    %680 = vdwg.mxu0
    %v682 = vrot.slane %v676, 1
    %v684 = vadd.f32 %v81, %v682
    %v685 = vmul.f32 %v684, %v93
    %v686 = vtanh.pop %v685
    %v687 = vmul.f32 %v686, %v93
    %v688 = vadd.f32 %v687, %v94
    %v690 = vrot.slane %v626, 7
    %v692 = vmul.f32 %v688, %v690
    %694 = vrot.lane.b32.xlu0 %v688, 32
    %v695 = vpop.permute.xlu0 %694
    %v697 = vmul.f32 %v688, %v695
    %699 = vrot.lane.b32.xlu0 %v697, 32
    %v700 = vpop.permute.xlu0 %699
    %v702 = vadd.f32 %v692, %v700
    %v703 = vtanh.pop %v702
    %705 = vrot.lane.b32.xlu0 %v703, 32
    %v706 = vpop.permute.xlu0 %705
    %v708 = vmul.f32 %v688, %v706
    %v709 = vpack.c.bf16 %v708, %v708
    %v710 = vld [vmem:[%s4] sm:$0xf]
    %v711 = vld [vmem:[%s4 + $0x4] sm:$0xf]
    %v712 = vld [vmem:[%s4 + $0x8] sm:$0xf]
    %v713 = vld [vmem:[%s4 + $0xc] sm:$0xf]
    %v714 = vld [vmem:[%s5] sm:$0x1]
    %v716 = vshrl.u32 %v709, 16
    %v718 = vrot.slane %v716, 3
    %719 = vrot.lane.b32.xlu0 %v718, 64
    %v720 = vpop.permute.xlu0 %719
    %v725 = vunpack.c.l.b16 %v710
    %v726 = vunpack.c.l.b16 %v711
    %v727 = vunpack.c.l.b16 %v712
    %v728 = vunpack.c.l.b16 %v713
    %v729 = vpack.c.b16 %v726, %v725
    %v730 = vpack.c.b16 %v728, %v727
    %v734 = vsel %vm107, %v720, 0
    %736 = vmatprep.subr.bf16.mxu0 0
    %737 = vmatpush1.bf16.msra.mxu0 %v729
    %738 = vmatprep.subr.bf16.mxu0 0
    %739 = vmatpush1.bf16.msra.mxu0 %v730
    %740 = vmatprep.subr.bf16.mxu0 0
    %741 = vmatpush1.bf16.msra.mxu0 0
    %742 = vmatprep.subr.bf16.mxu0 0
    %743 = vmatpush1.bf16.msra.mxu0 0
    %744 = vmatprep.subr.bf16.mxu0 0
    %745 = vmatpush1.bf16.msra.mxu0 0
    %746 = vmatprep.subr.bf16.mxu0 0
    %747 = vmatpush1.bf16.msra.mxu0 0
    %748 = vmatprep.subr.bf16.mxu0 0
    %749 = vmatpush1.bf16.msra.mxu0 0
    %750 = vmatprep.subr.bf16.mxu0 0
    %751 = vmatpush1.bf16.msra.mxu0 0
    %752 = vmatprep.subr.bf16.mxu0 0
    %753 = vmatpush1.bf16.msra.mxu0 0
    %754 = vmatprep.subr.bf16.mxu0 0
    %755 = vmatpush1.bf16.msra.mxu0 0
    %756 = vmatprep.subr.bf16.mxu0 0
    %757 = vmatpush1.bf16.msra.mxu0 0
    %758 = vmatprep.subr.bf16.mxu0 0
    %759 = vmatpush1.bf16.msra.mxu0 0
    %760 = vmatprep.subr.bf16.mxu0 0
    %761 = vmatpush1.bf16.msra.mxu0 0
    %762 = vmatprep.subr.bf16.mxu0 0
    %763 = vmatpush1.bf16.msra.mxu0 0
    %764 = vmatprep.subr.bf16.mxu0 0
    %765 = vmatpush1.bf16.msra.mxu0 0
    %766 = vmatprep.subr.bf16.mxu0 0
    %767 = vmatpush1.bf16.msra.mxu0 0
    %768 = vmatprep.mubr.bf16.mxu0 0
    %769 = vmatmul.mubr.bf16.gmra.mrb[0].mxu0 %v734
    %v770 = vpop.f32.mrb[0].mxu0
    %v771 = vadd.f32 %v714, %v770
    %v772 = vpop.f32.mrb[0].mxu0
    %v773 = vpop.f32.mrb[0].mxu0
    %v774 = vpop.f32.mrb[0].mxu0
    %775 = vdwg.mxu0
    %v776 = vmax.f32 %v771, -30.0
    %v777 = vmin.f32 %v776, 30.0
    %v778 = vmul.f32 %v777, 1.442695
    %v779 = vpow.pop %v778
    %v780 = vld [vmem:[%s6] sm:$0x1]
    %v782 = vlaneseq
    %v783 = vshrl.u32 %v782, 7
    %v784 = vsub.s32 0, %v783
    %v785 = vrot.slane %v780, %v784
    %786 = vrot.lane.b32.xlu0 %v785, 8
    %v787 = vpop.permute.xlu0 %786
    %v789 = vmul.f32 %v779, %v787
    %791 = vrot.lane.b32.xlu0 %v789, 120
    %v792 = vpop.permute.xlu0 %791
    %v794 = vadd.f32 %v771, %v792
    %vm795 = vcmask 57344
    %796 = vst.msk [vmem:[#allocation2] sm:$0x1] %vm795, %v794
    // Predicated region
    $region30: #{tpu_custom_call.1} parent=1 // pred_check
      _
    $region31: #{tpu_custom_call.1} parent=1 // pred_check_branch
      %798 = sbr.rel (0) target = $region33
    $region32: #{tpu_custom_call.1} parent=1 // pred_region
      %s800 = ssub.s32 16, 16
      %801 = vsyncadd [#allocation3], %s800
      %s803 = sshll.u32 [#allocation2], 4
      %s804 = int_to_ptr.vmem [resolvable:$true] %s803
      %806 = dma.vmem_to_hbm [thread:$0]  %s804, 16, %s7, [#allocation3]
    $region33: #{tpu_custom_call.1} parent=1 // pred_fallthru
      _
    // Predicated region
    $region34: #{tpu_custom_call.1} parent=1 // pred_check
      _
    $region35: #{tpu_custom_call.1} parent=1 // pred_check_branch
      %808 = sbr.rel (0) target = $region37
    $region36: #{tpu_custom_call.1} parent=1 // pred_region
      %809 = dma.done [#allocation3], 16
    $region37: #{tpu_custom_call.1} parent=1 // pred_fallthru
      _
    %810 = vsyncpa [#allocation3], 1

</llo_original>
